<compile_context>
chip_gen: v6e
topology: v6e:2x2x1
jax: 0.10.0
libtpu: 0.0.40
codegen_flags: <defaults>
</compile_context>

<pallas_src>
import jax
import jax.numpy as jnp
from jax.experimental import pallas as pl
from jax.experimental.pallas import tpu as pltpu


def _conv_matmul_kernel(w_ref, b_ref, p_ref, o_ref):
    # w_ref: (Cout, K)   bf16 reshaped conv weight (grid-invariant, stays resident)
    # b_ref: (Cout, 1)   f32 bias
    # p_ref: (K, tm)     bf16 im2col patch tile of one image
    # o_ref: (Cout, tm)  f32 output tile -> already in NCHW element order
    acc = jnp.dot(w_ref[...], p_ref[...], preferred_element_type=jnp.float32)
    o_ref[...] = (acc + b_ref[...]).astype(o_ref.dtype)


def _pick_m_tile(M, target=1024):
    """Largest multiple of 128 that divides M, capped at `target`; else full M."""
    if M % 128 != 0:
        return M  # small/odd case: full-extent block (allowed by the (8,128) rule)
    best = 128
    cand = 256
    while cand <= min(M, target):
        if M % cand == 0:
            best = cand
        cand += 128
    return best


def reflect_conv_forward(x, weight, bias, *, kernel_size=4, stride=2, pad=1):
    """Forward of reflect_conv.

    x:      (N, Cin, H, W)     float32, NCHW
    weight: (Cout, Cin, k, k)  PyTorch OIHW
    bias:   (Cout,)
    returns (N, Cout, H_out, W_out)
    """
    N, Cin, H, W = x.shape
    Cout = weight.shape[0]
    k, s = kernel_size, stride

    # Reflection pad (matches torch.nn.ReflectionPad2d) -- glue, stays in JAX.
    xp = jnp.pad(x, ((0, 0), (0, 0), (pad, pad), (pad, pad)), mode="reflect")
    Hp, Wp = H + 2 * pad, W + 2 * pad
    H_out = (Hp - k) // s + 1
    W_out = (Wp - k) // s + 1
    M = H_out * W_out
    K = Cin * k * k

    # Fused pad+im2col directly in the (N, K, M) layout the kernel consumes
    # (reduction order (Cin, kh, kw) matches the OIHW weight reshape). bf16 halves
    # the patch bytes through HBM.
    rows = []
    for kh in range(k):
        cols = []
        for kw in range(k):
            cols.append(xp[:, :, kh:kh + s * H_out:s, kw:kw + s * W_out:s])
        rows.append(jnp.stack(cols, axis=2))           # (N, Cin, k, H_out, W_out)
    patches = jnp.stack(rows, axis=2)                  # (N, Cin, k, k, H_out, W_out)
    patches = patches.reshape(N, K, M).astype(jnp.bfloat16)

    w2 = weight.reshape(Cout, K).astype(jnp.bfloat16)  # (Cout, K)
    b2 = bias.reshape(Cout, 1).astype(jnp.float32)     # (Cout, 1)

    tm = _pick_m_tile(M)
    m_tiles = M // tm

    # VMEM budget: double-buffered patch & output tiles + resident weight/bias,
    # with headroom; floor at the default scoped limit, cap below v7x's 64 MiB.
    need = 2 * (K * tm * 2 + Cout * tm * 4) + Cout * K * 2 + Cout * 4
    vmem_limit = int(min(48 * 1024 * 1024, max(32 * 1024 * 1024, 2 * need)))

    cost = pl.CostEstimate(
        flops=2 * N * M * K * Cout,
        transcendentals=0,
        bytes_accessed=(patches.size * 2 + w2.size * 2 + b2.size * 4
                        + N * Cout * M * 4),
    )

    out = pl.pallas_call(
        _conv_matmul_kernel,
        out_shape=jax.ShapeDtypeStruct((N, Cout, M), jnp.float32),
        grid_spec=pltpu.PrefetchScalarGridSpec(
            num_scalar_prefetch=0,
            grid=(N, m_tiles),
            in_specs=[
                # weight and bias are grid-invariant (full blocks, stay in VMEM)
                pl.BlockSpec((Cout, K), lambda n, m: (0, 0)),
                pl.BlockSpec((Cout, 1), lambda n, m: (0, 0)),
                # per-(image, spatial-tile) patch slab; batch dim squeezed
                pl.BlockSpec((None, K, tm), lambda n, m: (n, 0, m)),
            ],
            out_specs=pl.BlockSpec((None, Cout, tm), lambda n, m: (n, 0, m)),
        ),
        compiler_params=pltpu.CompilerParams(
            dimension_semantics=("parallel", "parallel"),
            vmem_limit_bytes=vmem_limit),
        cost_estimate=cost,
    )(w2, b2, patches)

    # (N, Cout, M) is already NCHW element order -> plain reshape, no transpose.
    return out.reshape(N, Cout, H_out, W_out).astype(x.dtype)


if __name__ == "__main__":
    # Small deterministic example consistent with the module's defaults.
    in_channels, out_channels = 4, 8
    kernel_size, stride, pad = 4, 2, 1
    N, H, W = 2, 16, 16

    key = jax.random.PRNGKey(0)
    kx, kw, kb = jax.random.split(key, 3)
    x = jax.random.normal(kx, (N, in_channels, H, W), dtype=jnp.float32)
    # Deterministic synthetic parameter init (shapes from nn.Conv2d(in, out, 4)).
    fan_in = in_channels * kernel_size * kernel_size
    bound = 1.0 / (fan_in ** 0.5)
    weight = jax.random.uniform(
        kw, (out_channels, in_channels, kernel_size, kernel_size),
        minval=-bound, maxval=bound, dtype=jnp.float32)
    bias = jax.random.uniform(
        kb, (out_channels,), minval=-bound, maxval=bound, dtype=jnp.float32)

    out = reflect_conv_forward(
        x, weight, bias, kernel_size=kernel_size, stride=stride, pad=pad)
    out = jax.block_until_ready(out)

    # Reference: reflection pad + VALID conv using the same bf16 inputs / f32
    # accumulation as the kernel's MXU path.
    xp = jnp.pad(x, ((0, 0), (0, 0), (pad, pad), (pad, pad)), mode="reflect")
    ref = jax.lax.conv_general_dilated(
        xp.astype(jnp.bfloat16), weight.astype(jnp.bfloat16),
        window_strides=(stride, stride), padding="VALID",
        dimension_numbers=("NCHW", "OIHW", "NCHW"),
        preferred_element_type=jnp.float32) + bias[None, :, None, None]

    assert out.shape == (N, out_channels, H // 2, W // 2), out.shape
    assert jnp.allclose(out, ref, atol=2e-3, rtol=2e-3), float(
        jnp.max(jnp.abs(out - ref)))

    print("KERNEL_OK")
</pallas_src>

<mosaic_0001>
module attributes {stable_mosaic.version = 11 : i64} {
  func.func @_conv_matmul_kernel(%arg0: i32, %arg1: i32, %arg2: memref<8x64xbf16, #tpu.memory_space<vmem>>, %arg3: memref<8x1xf32, #tpu.memory_space<vmem>>, %arg4: memref<1x64x64xbf16, #tpu.memory_space<vmem>>, %arg5: memref<1x8x64xf32, #tpu.memory_space<vmem>>) attributes {dimension_semantics = [#tpu.dimension_semantics<parallel>, #tpu.dimension_semantics<parallel>], iteration_bounds = array<i64: 2, 1>, scalar_prefetch = 0 : i64, scratch_operands = 0 : i64, tpu.core_type = #tpu.core_type<tc>, window_params = [{pipeline_mode = #tpu.pipeline_mode<synchronous>, transform_indices = @transform_0, window_bounds = array<i64: 8, 64>}, {pipeline_mode = #tpu.pipeline_mode<synchronous>, transform_indices = @transform_1, window_bounds = array<i64: 8, 1>}, {transform_indices = @transform_2, window_bounds = array<i64: 1, 64, 64>}, {transform_indices = @transform_3, window_bounds = array<i64: 1, 8, 64>}]} {
    %c0 = arith.constant 0 : index
    %c0_0 = arith.constant 0 : index
    %0 = vector.load %arg2[%c0, %c0_0] : memref<8x64xbf16, #tpu.memory_space<vmem>>, vector<8x64xbf16>
    %c0_1 = arith.constant 0 : index
    %c0_2 = arith.constant 0 : index
    %c0_3 = arith.constant 0 : index
    %1 = vector.load %arg4[%c0_1, %c0_2, %c0_3] : memref<1x64x64xbf16, #tpu.memory_space<vmem>>, vector<1x64x64xbf16>
    %2 = vector.shape_cast %1 : vector<1x64x64xbf16> to vector<64x64xbf16>
    %cst = arith.constant dense<0.000000e+00> : vector<8x64xf32>
    %3 = tpu.matmul %0, %2, %cst {dimension_numbers = #tpu.dot_dimension_numbers<[1], [0], [0], [1], [0, 0, 1, 1], [], []>} : vector<8x64xbf16>, vector<64x64xbf16>, vector<8x64xf32> -> vector<8x64xf32>
    %c0_4 = arith.constant 0 : index
    %c0_5 = arith.constant 0 : index
    %4 = vector.load %arg3[%c0_4, %c0_5] : memref<8x1xf32, #tpu.memory_space<vmem>>, vector<8x1xf32>
    %5 = vector.broadcast %4 : vector<8x1xf32> to vector<8x64xf32>
    %6 = arith.addf %3, %5 : vector<8x64xf32>
    %c0_6 = arith.constant 0 : index
    %c0_7 = arith.constant 0 : index
    %c0_8 = arith.constant 0 : index
    %7 = vector.load %arg5[%c0_6, %c0_7, %c0_8] : memref<1x8x64xf32, #tpu.memory_space<vmem>>, vector<1x8x64xf32>
    %8 = vector.shape_cast %7 : vector<1x8x64xf32> to vector<8x64xf32>
    %9 = vector.shape_cast %6 : vector<8x64xf32> to vector<1x8x64xf32>
    tpu.vector_store %arg5[%c0_6, %c0_7, %c0_8], %9 {strides = array<i32>} : memref<1x8x64xf32, #tpu.memory_space<vmem>>, vector<1x8x64xf32>,
    return
  }
  func.func @transform_0(%arg0: i32, %arg1: i32) -> (i32, i32) {
    %c0_i32 = arith.constant 0 : i32
    %c0_i32_0 = arith.constant 0 : i32
    %c0_i32_1 = arith.constant 0 : i32
    return %c0_i32, %c0_i32_0 : i32, i32
  }
  func.func @transform_1(%arg0: i32, %arg1: i32) -> (i32, i32) {
    %c0_i32 = arith.constant 0 : i32
    %c0_i32_0 = arith.constant 0 : i32
    %c0_i32_1 = arith.constant 0 : i32
    return %c0_i32, %c0_i32_0 : i32, i32
  }
  func.func @transform_2(%arg0: i32, %arg1: i32) -> (i32, i32, i32) {
    %c0_i32 = arith.constant 0 : i32
    %c0_i32_0 = arith.constant 0 : i32
    return %arg0, %c0_i32, %arg1 : i32, i32, i32
  }
  func.func @transform_3(%arg0: i32, %arg1: i32) -> (i32, i32, i32) {
    %c0_i32 = arith.constant 0 : i32
    %c0_i32_0 = arith.constant 0 : i32
    return %arg0, %c0_i32, %arg1 : i32, i32, i32
  }
}

</mosaic_0001>

<llo_original>
// kernel: tpu_custom_call.1
$region0: #{tpu_custom_call.1}
  #allocation0 [shape = 'u32[]', space=smem, size = 0x4, offset = 0x4, fixed_abs, tag = 'smem constant byte address 0x4 - core index']
  #allocation1 [shape = 'u32[144,128]{1,0:T(1,128)}', space=vmem, size = 0x12000, scoped, tag = 'internal scratch']
  %s0 = inlined_call_operand.vmem [shape: bf16[8,64], index: 0, kind: input, shape index: {}]
  %s1 = inlined_call_operand.vmem [shape: f32[8,1], index: 1, kind: input, shape index: {}]
  %s2 = inlined_call_operand.hbm [shape: bf16[2,64,64], index: 2, kind: input, shape index: {}]
  %s3 = inlined_call_operand.hbm [shape: f32[2,8,64], index: 3, kind: output, shape index: {}]
  %s4 = sld [smem:[#allocation0]]
  $region49: #{tpu_custom_call.1} parent=0
    _
  %s6 = ssub.s32 1, %s4
  %s7 = scalar_select 0, %s6, %s4
  $region1: #{tpu_custom_call.1} parent=0
    #allocation2 [shape = 'u8[32768]{0}', space=vmem, size = 0x8000, scoped, tag = 'input window, operand 2']
    #allocation3 [shape = 's32[2]{0}', space=sflag, size = 0x8, scoped, tag = 'scoped memory for tpu_custom_call.1']
    #allocation4 [shape = 's32[2]{0}', space=sflag, size = 0x8, scoped, tag = 'scoped memory for tpu_custom_call.1']
    #allocation5 [shape = 'u8[8192]{0}', space=vmem, size = 0x2000, scoped, tag = 'output window, operand 0']
    %8 = vsyncpa [#allocation3], 0
    %s9 = scalar_lea.sflag [#allocation3], 1
    %10 = vsyncpa %s9, 0
    %11 = vsyncpa [#allocation4], 0
    %s12 = scalar_lea.sflag [#allocation4], 1
    %13 = vsyncpa %s12, 0
    loop: start=0, step=1, limit=4
    $region2: #{tpu_custom_call.1} parent=1 // loop_pre_header
      _
    $region3: #{tpu_custom_call.1} parent=1 // loop_header
      %s15 = sphi 0, %s19
      %p16 = scmp.ge.s32.totalorder %s15, 4
      %s22 = sphi 0, %s34
      %s23 = sphi 0, %s30
      %s24 = sphi 0, %s22
      %s25 = sphi 0, %s23
      %s26 = sphi 0, %s24
      %s27 = sphi 0, %s25
      %s35 = sphi 0, %s35
      %s37 = sphi 0, %s35
      %s38 = sphi 0, %s37
      %s52 = sphi 0, %s38
      %s56 = sphi 0, %s56
      %s58 = sphi 0, %s56
      %s59 = sphi 0, %s58
      %s73 = sphi 0, %s59
      %s81 = sphi 0, %s83
      %s84 = sphi 0, %s81
      %s85 = sphi 0, %s84
      %s101 = sphi 0, %s85
      %s109 = sphi 0, %s111
      %s112 = sphi 0, %s109
      %s113 = sphi 0, %s112
      %s129 = sphi 0, %s113
    $region4: #{tpu_custom_call.1} parent=1 // loop_header_branch
      %18 = sbr.rel (%p16) target = $region8
    $region5: #{tpu_custom_call.1} parent=1 // loop_body
      %s20 = ssub.s32 %s15, 1
      %s21 = ssub.s32 %s15, 2
      %s28 = sadd.s32 1, %s23
      %p29 = scmp.ge.s32.totalorder %s28, 1
      %s30 = scalar_select %p29, 0, %s28
      %s31 = sadd.s32 1, %s22
      %s32 = scalar_select %p29, %s31, %s22
      %p33 = scmp.ge.s32.totalorder %s32, 2
      %s34 = scalar_select %p33, 0, %s32
      %s36 = sadd.s32 %s35, 1
      %p39 = scmp.eq.s32.totalorder %s15, 1
      %p40 = scmp.ne.s32.totalorder %s35, %s37
      %p41 = scmp.eq.s32.totalorder %s15, 0
      %p42 = por %p40, %p41
      %p43 = scmp.ne.s32.totalorder %s35, %s37
      %p44 = scmp.eq.s32.totalorder %s20, 1
      %p45 = por %p43, %p44
      %p46 = scmp.ne.s32.totalorder %s37, %s38
      %p47 = scmp.eq.s32.totalorder %s20, 0
      %p48 = por %p46, %p47
      %p49 = scmp.ne.s32.totalorder %s37, %s38
      %p50 = scmp.eq.s32.totalorder %s21, 1
      %p51 = por %p49, %p50
      %p53 = scmp.ne.s32.totalorder %s38, %s52
      %p54 = scmp.eq.s32.totalorder %s21, 0
      %p55 = por %p53, %p54
      %s57 = sadd.s32 %s56, 1
      %p60 = scmp.eq.s32.totalorder %s15, 1
      %p61 = scmp.ne.s32.totalorder %s56, %s58
      %p62 = scmp.eq.s32.totalorder %s15, 0
      %p63 = por %p61, %p62
      %p64 = scmp.ne.s32.totalorder %s56, %s58
      %p65 = scmp.eq.s32.totalorder %s20, 1
      %p66 = por %p64, %p65
      %p67 = scmp.ne.s32.totalorder %s58, %s59
      %p68 = scmp.eq.s32.totalorder %s20, 0
      %p69 = por %p67, %p68
      %p70 = scmp.ne.s32.totalorder %s58, %s59
      %p71 = scmp.eq.s32.totalorder %s21, 1
      %p72 = por %p70, %p71
      %p74 = scmp.ne.s32.totalorder %s59, %s73
      %p75 = scmp.eq.s32.totalorder %s21, 0
      %p76 = por %p74, %p75
      %s77 = ssub.s32 %s22, %s34
      %s78 = ssub.s32 %s23, %s30
      %s79 = sor.u32 %s77, %s78
      %p80 = scmp.eq.s32.totalorder %s79, 0
      %s82 = sadd.s32 %s81, 1
      %s83 = scalar_select %p80, %s81, %s82
      %p86 = pneg %p80
      %p87 = scmp.eq.s32.totalorder %s15, 1
      %p88 = por %p86, %p87
      %p89 = scmp.ne.s32.totalorder %s81, %s84
      %p90 = scmp.eq.s32.totalorder %s15, 0
      %p91 = por %p89, %p90
      %p92 = scmp.ne.s32.totalorder %s81, %s84
      %p93 = scmp.eq.s32.totalorder %s20, 1
      %p94 = por %p92, %p93
      %p95 = scmp.ne.s32.totalorder %s84, %s85
      %p96 = scmp.eq.s32.totalorder %s20, 0
      %p97 = por %p95, %p96
      %p98 = scmp.ne.s32.totalorder %s84, %s85
      %p99 = scmp.eq.s32.totalorder %s21, 1
      %p100 = por %p98, %p99
      %p102 = scmp.ne.s32.totalorder %s85, %s101
      %p103 = scmp.eq.s32.totalorder %s21, 0
      %p104 = por %p102, %p103
      %s105 = ssub.s32 %s22, %s34
      %s106 = ssub.s32 %s23, %s30
      %s107 = sor.u32 %s105, %s106
      %p108 = scmp.eq.s32.totalorder %s107, 0
      %s110 = sadd.s32 %s109, 1
      %s111 = scalar_select %p108, %s109, %s110
      %p114 = pneg %p108
      %p115 = scmp.eq.s32.totalorder %s15, 1
      %p116 = por %p114, %p115
      %p117 = scmp.ne.s32.totalorder %s109, %s112
      %p118 = scmp.eq.s32.totalorder %s15, 0
      %p119 = por %p117, %p118
      %p120 = scmp.ne.s32.totalorder %s109, %s112
      %p121 = scmp.eq.s32.totalorder %s20, 1
      %p122 = por %p120, %p121
      %p123 = scmp.ne.s32.totalorder %s112, %s113
      %p124 = scmp.eq.s32.totalorder %s20, 0
      %p125 = por %p123, %p124
      %p126 = scmp.ne.s32.totalorder %s112, %s113
      %p127 = scmp.eq.s32.totalorder %s21, 1
      %p128 = por %p126, %p127
      %p130 = scmp.ne.s32.totalorder %s113, %s129
      %p131 = scmp.eq.s32.totalorder %s21, 0
      %p132 = por %p130, %p131
      %p133 = scmp.le.s32.totalorder 1, %s15
      %p134 = scmp.lt.s32.totalorder %s15, 3
      %p135 = pnand %p133, %p134
      %p136 = pneg %p135
      // Predicated region
      $region9: #{tpu_custom_call.1} parent=5 // pred_check
        _
      $region10: #{tpu_custom_call.1} parent=5 // pred_check_branch
        %138 = sbr.rel (%p135) target = $region12
      $region11: #{tpu_custom_call.1} parent=5 // pred_region
        %s139 = ssub.s32 %s15, 1
        // Predicated region
        $region13: #{tpu_custom_call.1} parent=11 // pred_check
          %p140 = pneg %p48
        $region14: #{tpu_custom_call.1} parent=11 // pred_check_branch
          %142 = sbr.rel (%p140) target = $region16
        $region15: #{tpu_custom_call.1} parent=11 // pred_region
          _
        $region16: #{tpu_custom_call.1} parent=11 // pred_fallthru
          _
        // Predicated region
        $region17: #{tpu_custom_call.1} parent=11 // pred_check
          %p143 = pneg %p69
        $region18: #{tpu_custom_call.1} parent=11 // pred_check_branch
          %145 = sbr.rel (%p143) target = $region20
        $region19: #{tpu_custom_call.1} parent=11 // pred_region
          _
        $region20: #{tpu_custom_call.1} parent=11 // pred_fallthru
          _
      $region12: #{tpu_custom_call.1} parent=5 // pred_fallthru
        _
      %p146 = scmp.lt.s32.totalorder %s15, 2
      // Predicated region
      $region21: #{tpu_custom_call.1} parent=5 // pred_check
        %p147 = pneg %p146
      $region22: #{tpu_custom_call.1} parent=5 // pred_check_branch
        %149 = sbr.rel (%p147) target = $region24
      $region23: #{tpu_custom_call.1} parent=5 // pred_region
        // Predicated region
        $region25: #{tpu_custom_call.1} parent=23 // pred_check
          %p150 = pneg %p91
        $region26: #{tpu_custom_call.1} parent=23 // pred_check_branch
          %152 = sbr.rel (%p150) target = $region28
        $region27: #{tpu_custom_call.1} parent=23 // pred_region
          %s153 = sand.u32 %s81, 1
          %s154 = scalar_lea.sflag [#allocation3], %s153
          %s155 = sand.u32 %s81, 1
          %s156 = smul.addr %s155, 32
          %s157 = scalar_lea.vmem [#allocation2], %s156
          %s159 = ssub.s32 512, 512
          %160 = vsyncadd %s154, %s159
          %s161 = smul.addr %s22, 8
          %s162 = sadd.s32 %s23, %s161
          %s163 = smul.addr %s162, 64
          %s164 = scalar_lea.hbm %s2, %s163
          %s165 = sshll.u32 %s157, 4
          %s166 = int_to_ptr.vmem [resolvable:$true] %s165
          %171 = dma.hbm_to_vmem [thread:$0]  %s164, 512, %s166, %s154, 64, 64, 4
        $region28: #{tpu_custom_call.1} parent=23 // pred_fallthru
          _
      $region24: #{tpu_custom_call.1} parent=5 // pred_fallthru
        _
      %p172 = scmp.le.s32.totalorder 1, %s15
      %p173 = scmp.lt.s32.totalorder %s15, 3
      %p174 = pnand %p172, %p173
      %p175 = pneg %p174
      // Predicated region
      $region29: #{tpu_custom_call.1} parent=5 // pred_check
        _
      $region30: #{tpu_custom_call.1} parent=5 // pred_check_branch
        %177 = sbr.rel (%p174) target = $region32
      $region31: #{tpu_custom_call.1} parent=5 // pred_region
        %s178 = ssub.s32 %s15, 1
        %s179 = sand.u32 %s84, 1
        %s180 = scalar_lea.sflag [#allocation3], %s179
        %s181 = sand.u32 %s84, 1
        %s182 = smul.addr %s181, 32
        %s183 = scalar_lea.vmem [#allocation2], %s182
        // Predicated region
        $region33: #{tpu_custom_call.1} parent=31 // pred_check
          %p184 = pneg %p97
        $region34: #{tpu_custom_call.1} parent=31 // pred_check_branch
          %186 = sbr.rel (%p184) target = $region36
        $region35: #{tpu_custom_call.1} parent=31 // pred_region
          %187 = dma.done %s180, 512
        $region36: #{tpu_custom_call.1} parent=31 // pred_fallthru
          _
        %p188 = pneg %p48
        %p189 = pneg %p45
        %p190 = pneg %p69
        %p191 = pneg %p66
        %s192 = sand.u32 %s84, 1
        %s193 = scalar_lea.sflag [#allocation3], %s192
        %s194 = sand.u32 %s84, 1
        %s195 = smul.addr %s194, 32
        %s196 = scalar_lea.vmem [#allocation2], %s195
        %p197 = pneg %p97
        %p198 = pneg %p94
        %p199 = pneg %p125
        %p200 = pneg %p122
        %s201 = sand.u32 %s112, 1
        %s202 = scalar_lea.sflag [#allocation4], %s201
        %s203 = sand.u32 %s112, 1
        %s204 = smul.addr %s203, 8
        %s205 = scalar_lea.vmem [#allocation5], %s204
        %v207 = vld [vmem:[%s0] sm:$0xf]
        %v208 = vld [vmem:[%s183] sm:$0xf]
        %v209 = vld [vmem:[%s183 + $0x4] sm:$0xf]
        %v210 = vld [vmem:[%s183 + $0x8] sm:$0xf]
        %v211 = vld [vmem:[%s183 + $0xc] sm:$0xf]
        %v212 = vld [vmem:[%s183 + $0x10] sm:$0xf]
        %v213 = vld [vmem:[%s183 + $0x14] sm:$0xf]
        %v214 = vld [vmem:[%s183 + $0x18] sm:$0xf]
        %v215 = vld [vmem:[%s183 + $0x1c] sm:$0xf]
        %v216 = vld [vmem:[%s1] sm:$0xff]
        %218 = vset.pattern.permute.xlu0 0
        %219 = vperm.xlu0 %218, %v216
        %v220 = vpop.permute.xlu0 %219
        %v230 = vunpack.c.l.b16 %v208
        %v231 = vunpack.c.l.b16 %v209
        %v232 = vunpack.c.l.b16 %v210
        %v233 = vunpack.c.l.b16 %v211
        %v234 = vunpack.c.l.b16 %v212
        %v235 = vunpack.c.l.b16 %v213
        %v236 = vunpack.c.l.b16 %v214
        %v237 = vunpack.c.l.b16 %v215
        %v238 = vpack.c.b16 %v231, %v230
        %v239 = vpack.c.b16 %v233, %v232
        %v240 = vpack.c.b16 %v235, %v234
        %v241 = vpack.c.b16 %v237, %v236
        %vm246 = vcmask 523264
        %v248 = vsel %vm246, %v207, 0
        %250 = vmatprep.subr.bf16.mxu0 0
        %251 = vmatpush1.bf16.msra.mxu0 0
        %252 = vmatprep.subr.bf16.mxu0 0
        %253 = vmatpush1.bf16.msra.mxu0 0
        %254 = vmatprep.subr.bf16.mxu0 0
        %255 = vmatpush1.bf16.msra.mxu0 0
        %256 = vmatprep.subr.bf16.mxu0 0
        %257 = vmatpush1.bf16.msra.mxu0 0
        %258 = vmatprep.subr.bf16.mxu0 0
        %259 = vmatpush1.bf16.msra.mxu0 %v241
        %260 = vmatprep.subr.bf16.mxu0 0
        %261 = vmatpush1.bf16.msra.mxu0 %v240
        %262 = vmatprep.subr.bf16.mxu0 0
        %263 = vmatpush1.bf16.msra.mxu0 %v239
        %264 = vmatprep.subr.bf16.mxu0 0
        %265 = vmatpush1.bf16.msra.mxu0 %v238
        %266 = vmatprep.subr.bf16.mxu0 0
        %267 = vmatpush2.bf16.msra.mxu0 0
        %268 = vmatprep.subr.bf16.mxu0 0
        %269 = vmatpush2.bf16.msra.mxu0 0
        %270 = vmatprep.subr.bf16.mxu0 0
        %271 = vmatpush2.bf16.msra.mxu0 0
        %272 = vmatprep.subr.bf16.mxu0 0
        %273 = vmatpush2.bf16.msra.mxu0 0
        %274 = vmatprep.subr.bf16.mxu0 0
        %275 = vmatpush2.bf16.msra.mxu0 0
        %276 = vmatprep.subr.bf16.mxu0 0
        %277 = vmatpush2.bf16.msra.mxu0 0
        %278 = vmatprep.subr.bf16.mxu0 0
        %279 = vmatpush2.bf16.msra.mxu0 0
        %280 = vmatprep.subr.bf16.mxu0 0
        %281 = vmatpush2.bf16.msra.mxu0 0
        %282 = vmatprep.mubr.bf16.mxu0 0
        %283 = vmatmul.mubr.bf16.gmra.mxu0 %v248
        %v284 = vpop.f32.mrf.mxu0
        %v285 = vadd.f32 %v220, %v284
        %v286 = vpop.f32.mrf.mxu0
        %v287 = vpop.f32.mrf.mxu0
        %v288 = vpop.f32.mrf.mxu0
        %289 = vdwg.mxu0
        %290 = vst.msk [vmem:[%s205] sm:$0xff] %vm246, %v285
        %s291 = sand.u32 %s112, 1
        %s292 = scalar_lea.sflag [#allocation4], %s291
        %s293 = sand.u32 %s112, 1
        %s294 = smul.addr %s293, 8
        %s295 = scalar_lea.vmem [#allocation5], %s294
        // Predicated region
        $region37: #{tpu_custom_call.1} parent=31 // pred_check
          %p296 = pneg %p122
        $region38: #{tpu_custom_call.1} parent=31 // pred_check_branch
          %298 = sbr.rel (%p296) target = $region40
        $region39: #{tpu_custom_call.1} parent=31 // pred_region
          %s300 = ssub.s32 128, 128
          %301 = vsyncadd %s292, %s300
          %s302 = sadd.s32 %s25, %s24
          %s303 = smul.addr %s302, 128
          %s304 = scalar_lea.hbm %s3, %s303
          %s306 = sshll.u32 %s295, 4
          %s307 = int_to_ptr.vmem [resolvable:$true] %s306
          %309 = dma.vmem_to_hbm [thread:$0]  %s307, 128, %s304, %s292
        $region40: #{tpu_custom_call.1} parent=31 // pred_fallthru
          _
      $region32: #{tpu_custom_call.1} parent=5 // pred_fallthru
        _
      %p310 = scmp.le.s32.totalorder 2, %s15
      // Predicated region
      $region41: #{tpu_custom_call.1} parent=5 // pred_check
        %p311 = pneg %p310
      $region42: #{tpu_custom_call.1} parent=5 // pred_check_branch
        %313 = sbr.rel (%p311) target = $region44
      $region43: #{tpu_custom_call.1} parent=5 // pred_region
        %s314 = ssub.s32 %s15, 2
        // Predicated region
        $region45: #{tpu_custom_call.1} parent=43 // pred_check
          %p315 = pneg %p128
        $region46: #{tpu_custom_call.1} parent=43 // pred_check_branch
          %317 = sbr.rel (%p315) target = $region48
        $region47: #{tpu_custom_call.1} parent=43 // pred_region
          %s318 = sand.u32 %s113, 1
          %s319 = scalar_lea.sflag [#allocation4], %s318
          %s320 = sand.u32 %s113, 1
          %s321 = smul.addr %s320, 8
          %s322 = scalar_lea.vmem [#allocation5], %s321
          %323 = dma.done %s319, 128
        $region48: #{tpu_custom_call.1} parent=43 // pred_fallthru
          _
      $region44: #{tpu_custom_call.1} parent=5 // pred_fallthru
        _
    $region6: #{tpu_custom_call.1} parent=1 // loop_footer
      %s19 = sadd.s32 1, %s15
    $region7: #{tpu_custom_call.1} parent=1 // loop_footer_branch
      %14 = sbr.rel target = $region3
    $region8: #{tpu_custom_call.1} parent=1 // loop_exit
      _
    %324 = vsyncpa [#allocation3], 1
    %s325 = scalar_lea.sflag [#allocation3], 1
    %326 = vsyncpa %s325, 1
    %327 = vsyncpa [#allocation4], 1
    %s328 = scalar_lea.sflag [#allocation4], 1
    %329 = vsyncpa %s328, 1

</llo_original>
